<compile_context>
chip_gen: v6e
topology: v6e:2x2x1
jax: 0.10.0
libtpu: 0.0.40
codegen_flags: <defaults>
</compile_context>

<pallas_src>
import functools

import jax
import jax.numpy as jnp
from jax.experimental import pallas as pl
from jax.experimental.pallas import tpu as pltpu

_LANE = 128          # vreg lane width (last dim)
_SUBLANE = 8         # vreg sublane count (second-to-last dim)
_MAX_BATCH_TILE = 256


def _round_up(x, m):
    return ((x + m - 1) // m) * m


def _vmem_limit_bytes(tm, in_p, h_p, out_p, num_hidden):
    """Scoped-VMEM budget derived from the actual buffer plan (+ headroom)."""
    bf16, f32 = 2, 4
    db = 2  # BlockSpec double buffering
    total = 0
    total += db * tm * in_p * bf16            # x block
    total += db * in_p * h_p * bf16           # W_in^T
    total += db * h_p * f32                   # b_in
    if num_hidden > 0:
        total += db * h_p * h_p * bf16        # one hidden-layer weight block
        total += db * h_p * f32               # one hidden-layer bias block
    total += db * h_p * out_p * bf16          # W_out^T
    total += db * out_p * f32                 # b_out
    total += db * tm * out_p * f32            # output block
    total += tm * h_p * bf16                  # activation scratch
    total += 8 << 20                          # compiler-internal headroom
    return max(min(total, 100 << 20), 32 << 20)


def _fused_mlp_kernel(x_ref, w_in_ref, b_in_ref, w_hid_ref, b_hid_ref,
                      w_out_ref, b_out_ref, o_ref, act_ref, *,
                      num_hidden: int, num_steps: int):
    """Grid = (batch_tiles, num_steps), num_steps = num_hidden + 2.

    step 0             : act = relu(x @ W_in + b_in)
    step 1..num_hidden : act = relu(act @ W_hid[step-1] + b_hid[step-1])
    step num_steps - 1 : out = act @ W_out + b_out
    All dots take bf16 operands and accumulate in f32; the epilogue (bias +
    ReLU) stays in f32 and is downcast once when stored to the bf16 scratch.
    """
    step = pl.program_id(1)

    @pl.when(step == 0)
    def _input_layer():
        acc = jnp.dot(x_ref[...], w_in_ref[...],
                      preferred_element_type=jnp.float32)
        act_ref[...] = jnp.maximum(acc + b_in_ref[...], 0.0).astype(act_ref.dtype)

    @pl.when(jnp.logical_and(step >= 1, step <= num_hidden))
    def _hidden_layer():
        acc = jnp.dot(act_ref[...], w_hid_ref[0],
                      preferred_element_type=jnp.float32)
        act_ref[...] = jnp.maximum(acc + b_hid_ref[0], 0.0).astype(act_ref.dtype)

    @pl.when(step == num_steps - 1)
    def _output_layer():
        acc = jnp.dot(act_ref[...], w_out_ref[...],
                      preferred_element_type=jnp.float32)
        o_ref[...] = (acc + b_out_ref[...]).astype(o_ref.dtype)


def _mlp_no_hidden_kernel(x_ref, w_in_ref, b_in_ref, w_out_ref, b_out_ref, o_ref):
    """num_layers == 0 specialization: activation stays a register value."""
    act = jnp.maximum(
        jnp.dot(x_ref[...], w_in_ref[...], preferred_element_type=jnp.float32)
        + b_in_ref[...], 0.0).astype(jnp.bfloat16)
    o_ref[...] = (jnp.dot(act, w_out_ref[...], preferred_element_type=jnp.float32)
                  + b_out_ref[...]).astype(o_ref.dtype)


def init_params(key, num_layers, hidden_size, input_size, output_size):
    """Deterministic init mimicking nn.Linear default (uniform +/- 1/sqrt(fan_in))."""
    def linear_init(key, out_f, in_f):
        kw, kb = jax.random.split(key)
        bound = 1.0 / jnp.sqrt(jnp.float32(in_f))
        w = jax.random.uniform(kw, (out_f, in_f), jnp.float32, -bound, bound)
        b = jax.random.uniform(kb, (1, out_f), jnp.float32, -bound, bound)
        return w, b

    keys = jax.random.split(key, num_layers + 2)
    return {
        "input": linear_init(keys[0], hidden_size, input_size),
        "hidden": [linear_init(keys[1 + i], hidden_size, hidden_size)
                   for i in range(num_layers)],
        "output": linear_init(keys[-1], output_size, hidden_size),
    }


def pack_params(params):
    """Pre-transpose weights to (in_f, out_f), zero-pad feature dims to 128
    lanes, cast weights to bf16 (biases stay f32), stack hidden layers."""
    w_in, b_in = params["input"]      # (H, I), (1, H)
    w_out, b_out = params["output"]   # (O, H), (1, O)
    hid = params["hidden"]            # list of ((H, H), (1, H))

    in_f, hidden, out_f = w_in.shape[1], w_in.shape[0], w_out.shape[0]
    in_p = _round_up(in_f, _LANE)
    h_p = _round_up(hidden, _LANE)
    out_p = _round_up(out_f, _LANE)

    def pad2(a, rows, cols):
        return jnp.pad(a, ((0, rows - a.shape[0]), (0, cols - a.shape[1])))

    bf = jnp.bfloat16
    w_in_p = pad2(w_in.T, in_p, h_p).astype(bf)      # (in_p, h_p) bf16
    b_in_p = pad2(b_in, 1, h_p)                      # (1, h_p)    f32
    w_out_p = pad2(w_out.T, h_p, out_p).astype(bf)   # (h_p, out_p) bf16
    b_out_p = pad2(b_out, 1, out_p)                  # (1, out_p)  f32

    num_layers = len(hid)
    if num_layers > 0:
        w_hid_p = jnp.stack([pad2(w.T, h_p, h_p) for w, _ in hid]).astype(bf)  # (L,h_p,h_p)
        b_hid_p = jnp.stack([pad2(b, 1, h_p) for _, b in hid])                 # (L,1,h_p) f32
    else:
        w_hid_p, b_hid_p = None, None   # no placeholder DMA for L == 0

    dims = dict(in_f=in_f, hidden=hidden, out_f=out_f,
                in_p=in_p, h_p=h_p, out_p=out_p, num_layers=num_layers)
    return (w_in_p, b_in_p, w_hid_p, b_hid_p, w_out_p, b_out_p), dims


def net_forward(x, packed, dims):
    """x: (B, input_size) -> (B, output_size). Whole MLP in one pallas_call."""
    B, in_f = x.shape
    assert in_f == dims["in_f"]
    in_p, h_p, out_p = dims["in_p"], dims["h_p"], dims["out_p"]
    num_hidden = dims["num_layers"]

    # Batch tiling: one tile for small B; multiple "parallel" M tiles so v7x's
    # two TensorCores can split the batch when it grows.
    b_p = _round_up(B, _SUBLANE)
    tm = b_p if b_p <= _MAX_BATCH_TILE else _MAX_BATCH_TILE
    b_p = _round_up(b_p, tm)
    m_tiles = b_p // tm

    # Zero padding is exact through the matmul/ReLU chain; padded rows/cols
    # are sliced off at the end.
    x_p = jnp.pad(x, ((0, b_p - B), (0, in_p - in_f))).astype(jnp.bfloat16)
    w_in_p, b_in_p, w_hid_p, b_hid_p, w_out_p, b_out_p = packed

    flops = 2 * B * (dims["in_f"] * dims["hidden"]
                     + num_hidden * dims["hidden"] * dims["hidden"]
                     + dims["hidden"] * dims["out_f"])
    weight_bytes = 2 * (in_p * h_p + num_hidden * h_p * h_p + h_p * out_p)
    bytes_accessed = (x_p.size * 2 + weight_bytes
                      + 4 * ((num_hidden + 1) * h_p + out_p)
                      + b_p * out_p * 4)
    cost = pl.CostEstimate(flops=flops, transcendentals=0,
                           bytes_accessed=bytes_accessed)
    vmem_bytes = _vmem_limit_bytes(tm, in_p, h_p, out_p, num_hidden)

    if num_hidden == 0:
        out_padded = pl.pallas_call(
            _mlp_no_hidden_kernel,
            out_shape=jax.ShapeDtypeStruct((b_p, out_p), jnp.float32),
            grid=(m_tiles,),
            in_specs=[
                pl.BlockSpec((tm, in_p), lambda m: (m, 0)),     # x
                pl.BlockSpec((in_p, h_p), lambda m: (0, 0)),    # W_in^T
                pl.BlockSpec((1, h_p), lambda m: (0, 0)),       # b_in
                pl.BlockSpec((h_p, out_p), lambda m: (0, 0)),   # W_out^T
                pl.BlockSpec((1, out_p), lambda m: (0, 0)),     # b_out
            ],
            out_specs=pl.BlockSpec((tm, out_p), lambda m: (m, 0)),
            compiler_params=pltpu.CompilerParams(
                dimension_semantics=("parallel",),
                vmem_limit_bytes=vmem_bytes),
            cost_estimate=cost,
        )(x_p, w_in_p, b_in_p, w_out_p, b_out_p)
        return out_padded[:B, :dims["out_f"]]

    num_steps = num_hidden + 2

    def layer_w_idx(m, s):
        # Clamp so step 0 prefetches layer 0 and the output step re-uses the
        # last layer's (already resident) block -> per-layer weight DMA
        # overlaps the previous layer's matmul via BlockSpec double-buffering.
        del m
        return (jnp.maximum(jnp.minimum(s - 1, num_hidden - 1), 0), 0, 0)

    kernel = functools.partial(_fused_mlp_kernel,
                               num_hidden=num_hidden, num_steps=num_steps)
    out_padded = pl.pallas_call(
        kernel,
        out_shape=jax.ShapeDtypeStruct((b_p, out_p), jnp.float32),
        grid=(m_tiles, num_steps),
        in_specs=[
            pl.BlockSpec((tm, in_p), lambda m, s: (m, 0)),       # x
            pl.BlockSpec((in_p, h_p), lambda m, s: (0, 0)),      # W_in^T
            pl.BlockSpec((1, h_p), lambda m, s: (0, 0)),         # b_in
            pl.BlockSpec((1, h_p, h_p), layer_w_idx),            # W_hid^T[layer]
            pl.BlockSpec((1, 1, h_p), layer_w_idx),              # b_hid[layer]
            pl.BlockSpec((h_p, out_p), lambda m, s: (0, 0)),     # W_out^T
            pl.BlockSpec((1, out_p), lambda m, s: (0, 0)),       # b_out
        ],
        out_specs=pl.BlockSpec((tm, out_p), lambda m, s: (m, 0)),
        scratch_shapes=[pltpu.VMEM((tm, h_p), jnp.bfloat16)],    # resident activation
        compiler_params=pltpu.CompilerParams(
            dimension_semantics=("parallel", "arbitrary"),
            vmem_limit_bytes=vmem_bytes),
        cost_estimate=cost,
    )(x_p, w_in_p, b_in_p, w_hid_p, b_hid_p, w_out_p, b_out_p)

    return out_padded[:B, :dims["out_f"]]


if __name__ == "__main__":
    num_layers = 2
    input_size = 16
    hidden_size = 32
    output_size = 8
    batch = 2

    key = jax.random.PRNGKey(0)
    kx, kp = jax.random.split(key)
    x = jax.random.normal(kx, (batch, input_size), dtype=jnp.float32)
    params = init_params(kp, num_layers, hidden_size, input_size, output_size)

    packed, dims = pack_params(params)
    out = net_forward(x, packed, dims)
    jax.block_until_ready(out)
    assert out.shape == (batch, output_size)

    # Reference 1: same numerics as the kernel (bf16 dot inputs, f32 accumulate,
    # f32 bias/ReLU epilogue) -> tight tolerance.
    def ref_forward_bf16(x, params):
        bf = jnp.bfloat16
        w, b = params["input"]
        h = jnp.maximum(jnp.dot(x.astype(bf), w.T.astype(bf),
                                preferred_element_type=jnp.float32) + b, 0.0).astype(bf)
        for w, b in params["hidden"]:
            h = jnp.maximum(jnp.dot(h, w.T.astype(bf),
                                    preferred_element_type=jnp.float32) + b, 0.0).astype(bf)
        w, b = params["output"]
        return jnp.dot(h, w.T.astype(bf), preferred_element_type=jnp.float32) + b

    # Reference 2: pure f32 semantics of the original module (loose tolerance:
    # the bf16 weight cast is a deliberate numerics change).
    def ref_forward_f32(x, params):
        w, b = params["input"]
        h = jnp.maximum(x @ w.T + b, 0.0)
        for w, b in params["hidden"]:
            h = jnp.maximum(h @ w.T + b, 0.0)
        w, b = params["output"]
        return h @ w.T + b

    ref_bf16 = ref_forward_bf16(x, params)
    ref_f32 = ref_forward_f32(x, params)
    assert jnp.allclose(out, ref_bf16, atol=1e-3, rtol=1e-3), "mismatch vs bf16-matched reference"
    assert jnp.allclose(out, ref_f32, atol=1.5e-1, rtol=1.5e-1), "mismatch vs f32 reference"

    print("KERNEL_OK")
</pallas_src>

<mosaic_0001>
module attributes {stable_mosaic.version = 11 : i64} {
  func.func @_fused_mlp_kernel(%arg0: i32, %arg1: i32, %arg2: memref<8x128xbf16, #tpu.memory_space<vmem>>, %arg3: memref<128x128xbf16, #tpu.memory_space<vmem>>, %arg4: memref<1x128xf32, #tpu.memory_space<vmem>>, %arg5: memref<1x128x128xbf16, #tpu.memory_space<vmem>>, %arg6: memref<1x1x128xf32, #tpu.memory_space<vmem>>, %arg7: memref<128x128xbf16, #tpu.memory_space<vmem>>, %arg8: memref<1x128xf32, #tpu.memory_space<vmem>>, %arg9: memref<8x128xf32, #tpu.memory_space<vmem>>, %arg10: memref<8x128xbf16, #tpu.memory_space<vmem>>) attributes {dimension_semantics = [#tpu.dimension_semantics<parallel>, #tpu.dimension_semantics<arbitrary>], iteration_bounds = array<i64: 1, 4>, scalar_prefetch = 0 : i64, scratch_operands = 1 : i64, tpu.core_type = #tpu.core_type<tc>, window_params = [{transform_indices = @transform_0, window_bounds = array<i64: 8, 128>}, {pipeline_mode = #tpu.pipeline_mode<synchronous>, transform_indices = @transform_1, window_bounds = array<i64: 128, 128>}, {pipeline_mode = #tpu.pipeline_mode<synchronous>, transform_indices = @transform_2, window_bounds = array<i64: 1, 128>}, {transform_indices = @transform_3, window_bounds = array<i64: 1, 128, 128>}, {transform_indices = @transform_4, window_bounds = array<i64: 1, 1, 128>}, {pipeline_mode = #tpu.pipeline_mode<synchronous>, transform_indices = @transform_5, window_bounds = array<i64: 128, 128>}, {pipeline_mode = #tpu.pipeline_mode<synchronous>, transform_indices = @transform_6, window_bounds = array<i64: 1, 128>}, {transform_indices = @transform_7, window_bounds = array<i64: 8, 128>}]} {
    %c0_i32 = arith.constant 0 : i32
    %0 = arith.cmpi eq, %arg1, %c0_i32 : i32
    %1 = arith.extui %0 : i1 to i32
    %c0_i32_0 = arith.constant 0 : i32
    %2 = arith.cmpi ne, %1, %c0_i32_0 : i32
    scf.if %2 {
      %c0 = arith.constant 0 : index
      %c0_3 = arith.constant 0 : index
      %11 = vector.load %arg2[%c0, %c0_3] : memref<8x128xbf16, #tpu.memory_space<vmem>>, vector<8x128xbf16>
      %c0_4 = arith.constant 0 : index
      %c0_5 = arith.constant 0 : index
      %12 = vector.load %arg3[%c0_4, %c0_5] : memref<128x128xbf16, #tpu.memory_space<vmem>>, vector<128x128xbf16>
      %cst = arith.constant dense<0.000000e+00> : vector<8x128xf32>
      %13 = tpu.matmul %11, %12, %cst {dimension_numbers = #tpu.dot_dimension_numbers<[1], [0], [0], [1], [0, 0, 1, 1], [], []>} : vector<8x128xbf16>, vector<128x128xbf16>, vector<8x128xf32> -> vector<8x128xf32>
      %c0_6 = arith.constant 0 : index
      %c0_7 = arith.constant 0 : index
      %14 = vector.load %arg4[%c0_6, %c0_7] : memref<1x128xf32, #tpu.memory_space<vmem>>, vector<1x128xf32>
      %15 = vector.broadcast %14 : vector<1x128xf32> to vector<8x128xf32>
      %16 = arith.addf %13, %15 : vector<8x128xf32>
      %cst_8 = arith.constant 0.000000e+00 : f32
      %17 = vector.broadcast %cst_8 : f32 to vector<8x128xf32>
      %18 = arith.maximumf %16, %17 : vector<8x128xf32>
      %19 = arith.truncf %18 : vector<8x128xf32> to vector<8x128xbf16>
      %c0_9 = arith.constant 0 : index
      %c0_10 = arith.constant 0 : index
      %20 = vector.load %arg10[%c0_9, %c0_10] : memref<8x128xbf16, #tpu.memory_space<vmem>>, vector<8x128xbf16>
      tpu.vector_store %arg10[%c0_9, %c0_10], %19 {strides = array<i32>} : memref<8x128xbf16, #tpu.memory_space<vmem>>, vector<8x128xbf16>,
    } else {
    }
    %c1_i32 = arith.constant 1 : i32
    %3 = arith.cmpi sge, %arg1, %c1_i32 : i32
    %c2_i32 = arith.constant 2 : i32
    %4 = arith.cmpi sle, %arg1, %c2_i32 : i32
    %5 = arith.andi %3, %4 : i1
    %6 = arith.extui %5 : i1 to i32
    %c0_i32_1 = arith.constant 0 : i32
    %7 = arith.cmpi ne, %6, %c0_i32_1 : i32
    scf.if %7 {
      %c0 = arith.constant 0 : index
      %c0_3 = arith.constant 0 : index
      %11 = vector.load %arg10[%c0, %c0_3] : memref<8x128xbf16, #tpu.memory_space<vmem>>, vector<8x128xbf16>
      %c0_4 = arith.constant 0 : index
      %c0_5 = arith.constant 0 : index
      %c0_6 = arith.constant 0 : index
      %12 = vector.load %arg5[%c0_4, %c0_5, %c0_6] : memref<1x128x128xbf16, #tpu.memory_space<vmem>>, vector<1x128x128xbf16>
      %13 = vector.shape_cast %12 : vector<1x128x128xbf16> to vector<128x128xbf16>
      %cst = arith.constant dense<0.000000e+00> : vector<8x128xf32>
      %14 = tpu.matmul %11, %13, %cst {dimension_numbers = #tpu.dot_dimension_numbers<[1], [0], [0], [1], [0, 0, 1, 1], [], []>} : vector<8x128xbf16>, vector<128x128xbf16>, vector<8x128xf32> -> vector<8x128xf32>
      %c0_7 = arith.constant 0 : index
      %c0_8 = arith.constant 0 : index
      %c0_9 = arith.constant 0 : index
      %15 = vector.load %arg6[%c0_7, %c0_8, %c0_9] : memref<1x1x128xf32, #tpu.memory_space<vmem>>, vector<1x1x128xf32>
      %16 = vector.shape_cast %15 : vector<1x1x128xf32> to vector<1x128xf32>
      %17 = vector.broadcast %16 : vector<1x128xf32> to vector<8x128xf32>
      %18 = arith.addf %14, %17 : vector<8x128xf32>
      %cst_10 = arith.constant 0.000000e+00 : f32
      %19 = vector.broadcast %cst_10 : f32 to vector<8x128xf32>
      %20 = arith.maximumf %18, %19 : vector<8x128xf32>
      %21 = arith.truncf %20 : vector<8x128xf32> to vector<8x128xbf16>
      %c0_11 = arith.constant 0 : index
      %c0_12 = arith.constant 0 : index
      %22 = vector.load %arg10[%c0_11, %c0_12] : memref<8x128xbf16, #tpu.memory_space<vmem>>, vector<8x128xbf16>
      tpu.vector_store %arg10[%c0_11, %c0_12], %21 {strides = array<i32>} : memref<8x128xbf16, #tpu.memory_space<vmem>>, vector<8x128xbf16>,
    } else {
    }
    %c3_i32 = arith.constant 3 : i32
    %8 = arith.cmpi eq, %arg1, %c3_i32 : i32
    %9 = arith.extui %8 : i1 to i32
    %c0_i32_2 = arith.constant 0 : i32
    %10 = arith.cmpi ne, %9, %c0_i32_2 : i32
    scf.if %10 {
      %c0 = arith.constant 0 : index
      %c0_3 = arith.constant 0 : index
      %11 = vector.load %arg10[%c0, %c0_3] : memref<8x128xbf16, #tpu.memory_space<vmem>>, vector<8x128xbf16>
      %c0_4 = arith.constant 0 : index
      %c0_5 = arith.constant 0 : index
      %12 = vector.load %arg7[%c0_4, %c0_5] : memref<128x128xbf16, #tpu.memory_space<vmem>>, vector<128x128xbf16>
      %cst = arith.constant dense<0.000000e+00> : vector<8x128xf32>
      %13 = tpu.matmul %11, %12, %cst {dimension_numbers = #tpu.dot_dimension_numbers<[1], [0], [0], [1], [0, 0, 1, 1], [], []>} : vector<8x128xbf16>, vector<128x128xbf16>, vector<8x128xf32> -> vector<8x128xf32>
      %c0_6 = arith.constant 0 : index
      %c0_7 = arith.constant 0 : index
      %14 = vector.load %arg8[%c0_6, %c0_7] : memref<1x128xf32, #tpu.memory_space<vmem>>, vector<1x128xf32>
      %15 = vector.broadcast %14 : vector<1x128xf32> to vector<8x128xf32>
      %16 = arith.addf %13, %15 : vector<8x128xf32>
      %c0_8 = arith.constant 0 : index
      %c0_9 = arith.constant 0 : index
      %17 = vector.load %arg9[%c0_8, %c0_9] : memref<8x128xf32, #tpu.memory_space<vmem>>, vector<8x128xf32>
      tpu.vector_store %arg9[%c0_8, %c0_9], %16 {strides = array<i32>} : memref<8x128xf32, #tpu.memory_space<vmem>>, vector<8x128xf32>,
    } else {
    }
    return
  }
  func.func @transform_0(%arg0: i32, %arg1: i32) -> (i32, i32) {
    %c0_i32 = arith.constant 0 : i32
    %c0_i32_0 = arith.constant 0 : i32
    return %arg0, %c0_i32 : i32, i32
  }
  func.func @transform_1(%arg0: i32, %arg1: i32) -> (i32, i32) {
    %c0_i32 = arith.constant 0 : i32
    %c0_i32_0 = arith.constant 0 : i32
    %c0_i32_1 = arith.constant 0 : i32
    return %c0_i32, %c0_i32_0 : i32, i32
  }
  func.func @transform_2(%arg0: i32, %arg1: i32) -> (i32, i32) {
    %c0_i32 = arith.constant 0 : i32
    %c0_i32_0 = arith.constant 0 : i32
    %c0_i32_1 = arith.constant 0 : i32
    return %c0_i32, %c0_i32_0 : i32, i32
  }
  func.func @transform_3(%arg0: i32, %arg1: i32) -> (i32, i32, i32) {
    %c1_i32 = arith.constant 1 : i32
    %0 = arith.subi %arg1, %c1_i32 : i32
    %c1_i32_0 = arith.constant 1 : i32
    %1 = arith.minsi %0, %c1_i32_0 : i32
    %c0_i32 = arith.constant 0 : i32
    %2 = arith.maxsi %1, %c0_i32 : i32
    %c0_i32_1 = arith.constant 0 : i32
    %c0_i32_2 = arith.constant 0 : i32
    %c0_i32_3 = arith.constant 0 : i32
    return %2, %c0_i32_1, %c0_i32_2 : i32, i32, i32
  }
  func.func @transform_4(%arg0: i32, %arg1: i32) -> (i32, i32, i32) {
    %c1_i32 = arith.constant 1 : i32
    %0 = arith.subi %arg1, %c1_i32 : i32
    %c1_i32_0 = arith.constant 1 : i32
    %1 = arith.minsi %0, %c1_i32_0 : i32
    %c0_i32 = arith.constant 0 : i32
    %2 = arith.maxsi %1, %c0_i32 : i32
    %c0_i32_1 = arith.constant 0 : i32
    %c0_i32_2 = arith.constant 0 : i32
    %c0_i32_3 = arith.constant 0 : i32
    return %2, %c0_i32_1, %c0_i32_2 : i32, i32, i32
  }
  func.func @transform_5(%arg0: i32, %arg1: i32) -> (i32, i32) {
    %c0_i32 = arith.constant 0 : i32
    %c0_i32_0 = arith.constant 0 : i32
    %c0_i32_1 = arith.constant 0 : i32
    return %c0_i32, %c0_i32_0 : i32, i32
  }
  func.func @transform_6(%arg0: i32, %arg1: i32) -> (i32, i32) {
    %c0_i32 = arith.constant 0 : i32
    %c0_i32_0 = arith.constant 0 : i32
    %c0_i32_1 = arith.constant 0 : i32
    return %c0_i32, %c0_i32_0 : i32, i32
  }
  func.func @transform_7(%arg0: i32, %arg1: i32) -> (i32, i32) {
    %c0_i32 = arith.constant 0 : i32
    %c0_i32_0 = arith.constant 0 : i32
    return %arg0, %c0_i32 : i32, i32
  }
}

</mosaic_0001>

<llo_original>
// kernel: tpu_custom_call.1
$region0: #{tpu_custom_call.1}
  #allocation0 [shape = 'u32[]', space=smem, size = 0x4, offset = 0x4, fixed_abs, tag = 'smem constant byte address 0x4 - core index']
  #allocation1 [shape = 'u32[144,128]{1,0:T(1,128)}', space=vmem, size = 0x12000, scoped, tag = 'internal scratch']
  #allocation2 [shape = 'bf16[8,128]{1,0:T(8,128)(2,1)}', space=vmem, size = 0x800, scoped, tag = 'scratch operand']
  %s0 = inlined_call_operand.hbm [shape: bf16[8,128], index: 0, kind: input, shape index: {}]
  %s1 = inlined_call_operand.hbm [shape: bf16[128,128], index: 1, kind: input, shape index: {}]
  %s2 = inlined_call_operand.vmem [shape: f32[1,128], index: 2, kind: input, shape index: {}]
  %s3 = inlined_call_operand.hbm [shape: bf16[2,128,128], index: 3, kind: input, shape index: {}]
  %s4 = inlined_call_operand.vmem [shape: f32[2,1,128], index: 4, kind: input, shape index: {}]
  %s5 = inlined_call_operand.hbm [shape: bf16[128,128], index: 5, kind: input, shape index: {}]
  %s6 = inlined_call_operand.vmem [shape: f32[1,128], index: 6, kind: input, shape index: {}]
  %s7 = inlined_call_operand.hbm [shape: f32[8,128], index: 7, kind: output, shape index: {}]
  %s8 = sld [smem:[#allocation0]]
  $region89: #{tpu_custom_call.1} parent=0
    _
  %s10 = ssub.s32 1, %s8
  %s11 = scalar_select 0, %s10, %s8
  $region1: #{tpu_custom_call.1} parent=0
    #allocation3 [shape = 'u8[2048]{0}', space=vmem, size = 0x800, scoped, tag = 'input window, operand 0, single buffered']
    #allocation4 [shape = 's32[2]{0}', space=sflag, size = 0x8, scoped, tag = 'scoped memory for tpu_custom_call.1']
    #allocation5 [shape = 's32[2]{0}', space=sflag, size = 0x8, scoped, tag = 'scoped memory for tpu_custom_call.1']
    #allocation6 [shape = 'u8[32768]{0}', space=vmem, size = 0x8000, scoped, tag = 'input window, operand 1, single buffered']
    #allocation7 [shape = 's32[1]{0}', space=sflag, size = 0x4, scoped, tag = 'scoped memory for tpu_custom_call.1']
    #allocation8 [shape = 'u8[65536]{0}', space=vmem, size = 0x10000, scoped, tag = 'input window, operand 3']
    #allocation9 [shape = 'u8[32768]{0}', space=vmem, size = 0x8000, scoped, tag = 'input window, operand 5, single buffered']
    #allocation10 [shape = 'u8[4096]{0}', space=vmem, size = 0x1000, scoped, tag = 'output window, operand 0, single buffered']
    %12 = vsyncpa [#allocation4], 0
    %13 = vsyncpa [#allocation7], 0
    %14 = vsyncpa [#allocation5], 0
    loop: start=0, step=1, limit=6
    $region2: #{tpu_custom_call.1} parent=1 // loop_pre_header
      _
    $region3: #{tpu_custom_call.1} parent=1 // loop_header
      %s16 = sphi 0, %s20
      %p17 = scmp.ge.s32.totalorder %s16, 6
      %s23 = sphi 0, %s35
      %s24 = sphi 0, %s31
      %s25 = sphi 0, %s23
      %s26 = sphi 0, %s24
      %s27 = sphi 0, %s25
      %s28 = sphi 0, %s26
      %s38 = sphi 0, %s40
      %s41 = sphi 0, %s38
      %s42 = sphi 0, %s41
      %s58 = sphi 0, %s42
      %s62 = sphi 0, %s62
      %s64 = sphi 0, %s62
      %s65 = sphi 0, %s64
      %s79 = sphi 0, %s65
      %s83 = sphi 0, %s83
      %s85 = sphi 0, %s83
      %s86 = sphi 0, %s85
      %s100 = sphi 0, %s86
      %s116 = sphi 0, %s118
      %s119 = sphi 0, %s116
      %s120 = sphi 0, %s119
      %s136 = sphi 0, %s120
      %s152 = sphi 0, %s154
      %s155 = sphi 0, %s152
      %s156 = sphi 0, %s155
      %s172 = sphi 0, %s156
      %s176 = sphi 0, %s176
      %s178 = sphi 0, %s176
      %s179 = sphi 0, %s178
      %s193 = sphi 0, %s179
      %s197 = sphi 0, %s197
      %s199 = sphi 0, %s197
      %s200 = sphi 0, %s199
      %s214 = sphi 0, %s200
      %s220 = sphi 0, %s222
      %s223 = sphi 0, %s220
      %s224 = sphi 0, %s223
      %s240 = sphi 0, %s224
    $region4: #{tpu_custom_call.1} parent=1 // loop_header_branch
      %19 = sbr.rel (%p17) target = $region8
    $region5: #{tpu_custom_call.1} parent=1 // loop_body
      %s21 = ssub.s32 %s16, 1
      %s22 = ssub.s32 %s16, 2
      %s29 = sadd.s32 1, %s24
      %p30 = scmp.ge.s32.totalorder %s29, 4
      %s31 = scalar_select %p30, 0, %s29
      %s32 = sadd.s32 1, %s23
      %s33 = scalar_select %p30, %s32, %s23
      %p34 = scmp.ge.s32.totalorder %s33, 1
      %s35 = scalar_select %p34, 0, %s33
      %s36 = ssub.s32 %s23, %s35
      %p37 = scmp.eq.s32.totalorder %s36, 0
      %s39 = sadd.s32 %s38, 1
      %s40 = scalar_select %p37, %s38, %s39
      %p43 = pneg %p37
      %p44 = scmp.eq.s32.totalorder %s16, 3
      %p45 = por %p43, %p44
      %p46 = scmp.ne.s32.totalorder %s38, %s41
      %p47 = scmp.eq.s32.totalorder %s16, 0
      %p48 = por %p46, %p47
      %p49 = scmp.ne.s32.totalorder %s38, %s41
      %p50 = scmp.eq.s32.totalorder %s21, 3
      %p51 = por %p49, %p50
      %p52 = scmp.ne.s32.totalorder %s41, %s42
      %p53 = scmp.eq.s32.totalorder %s21, 0
      %p54 = por %p52, %p53
      %p55 = scmp.ne.s32.totalorder %s41, %s42
      %p56 = scmp.eq.s32.totalorder %s22, 3
      %p57 = por %p55, %p56
      %p59 = scmp.ne.s32.totalorder %s42, %s58
      %p60 = scmp.eq.s32.totalorder %s22, 0
      %p61 = por %p59, %p60
      %s63 = sadd.s32 %s62, 1
      %p66 = scmp.eq.s32.totalorder %s16, 3
      %p67 = scmp.ne.s32.totalorder %s62, %s64
      %p68 = scmp.eq.s32.totalorder %s16, 0
      %p69 = por %p67, %p68
      %p70 = scmp.ne.s32.totalorder %s62, %s64
      %p71 = scmp.eq.s32.totalorder %s21, 3
      %p72 = por %p70, %p71
      %p73 = scmp.ne.s32.totalorder %s64, %s65
      %p74 = scmp.eq.s32.totalorder %s21, 0
      %p75 = por %p73, %p74
      %p76 = scmp.ne.s32.totalorder %s64, %s65
      %p77 = scmp.eq.s32.totalorder %s22, 3
      %p78 = por %p76, %p77
      %p80 = scmp.ne.s32.totalorder %s65, %s79
      %p81 = scmp.eq.s32.totalorder %s22, 0
      %p82 = por %p80, %p81
      %s84 = sadd.s32 %s83, 1
      %p87 = scmp.eq.s32.totalorder %s16, 3
      %p88 = scmp.ne.s32.totalorder %s83, %s85
      %p89 = scmp.eq.s32.totalorder %s16, 0
      %p90 = por %p88, %p89
      %p91 = scmp.ne.s32.totalorder %s83, %s85
      %p92 = scmp.eq.s32.totalorder %s21, 3
      %p93 = por %p91, %p92
      %p94 = scmp.ne.s32.totalorder %s85, %s86
      %p95 = scmp.eq.s32.totalorder %s21, 0
      %p96 = por %p94, %p95
      %p97 = scmp.ne.s32.totalorder %s85, %s86
      %p98 = scmp.eq.s32.totalorder %s22, 3
      %p99 = por %p97, %p98
      %p101 = scmp.ne.s32.totalorder %s86, %s100
      %p102 = scmp.eq.s32.totalorder %s22, 0
      %p103 = por %p101, %p102
      %s104 = ssub.s32 %s24, 1
      %p105 = scmp.lt.s32.totalorder %s104, 1
      %s106 = scalar_select %p105, %s104, 1
      %p107 = scmp.gt.s32.totalorder %s106, 0
      %s108 = scalar_select %p107, %s106, 0
      %s109 = ssub.s32 %s31, 1
      %p110 = scmp.lt.s32.totalorder %s109, 1
      %s111 = scalar_select %p110, %s109, 1
      %p112 = scmp.gt.s32.totalorder %s111, 0
      %s113 = scalar_select %p112, %s111, 0
      %s114 = ssub.s32 %s108, %s113
      %p115 = scmp.eq.s32.totalorder %s114, 0
      %s117 = sadd.s32 %s116, 1
      %s118 = scalar_select %p115, %s116, %s117
      %p121 = pneg %p115
      %p122 = scmp.eq.s32.totalorder %s16, 3
      %p123 = por %p121, %p122
      %p124 = scmp.ne.s32.totalorder %s116, %s119
      %p125 = scmp.eq.s32.totalorder %s16, 0
      %p126 = por %p124, %p125
      %p127 = scmp.ne.s32.totalorder %s116, %s119
      %p128 = scmp.eq.s32.totalorder %s21, 3
      %p129 = por %p127, %p128
      %p130 = scmp.ne.s32.totalorder %s119, %s120
      %p131 = scmp.eq.s32.totalorder %s21, 0
      %p132 = por %p130, %p131
      %p133 = scmp.ne.s32.totalorder %s119, %s120
      %p134 = scmp.eq.s32.totalorder %s22, 3
      %p135 = por %p133, %p134
      %p137 = scmp.ne.s32.totalorder %s120, %s136
      %p138 = scmp.eq.s32.totalorder %s22, 0
      %p139 = por %p137, %p138
      %s140 = ssub.s32 %s24, 1
      %p141 = scmp.lt.s32.totalorder %s140, 1
      %s142 = scalar_select %p141, %s140, 1
      %p143 = scmp.gt.s32.totalorder %s142, 0
      %s144 = scalar_select %p143, %s142, 0
      %s145 = ssub.s32 %s31, 1
      %p146 = scmp.lt.s32.totalorder %s145, 1
      %s147 = scalar_select %p146, %s145, 1
      %p148 = scmp.gt.s32.totalorder %s147, 0
      %s149 = scalar_select %p148, %s147, 0
      %s150 = ssub.s32 %s144, %s149
      %p151 = scmp.eq.s32.totalorder %s150, 0
      %s153 = sadd.s32 %s152, 1
      %s154 = scalar_select %p151, %s152, %s153
      %p157 = pneg %p151
      %p158 = scmp.eq.s32.totalorder %s16, 3
      %p159 = por %p157, %p158
      %p160 = scmp.ne.s32.totalorder %s152, %s155
      %p161 = scmp.eq.s32.totalorder %s16, 0
      %p162 = por %p160, %p161
      %p163 = scmp.ne.s32.totalorder %s152, %s155
      %p164 = scmp.eq.s32.totalorder %s21, 3
      %p165 = por %p163, %p164
      %p166 = scmp.ne.s32.totalorder %s155, %s156
      %p167 = scmp.eq.s32.totalorder %s21, 0
      %p168 = por %p166, %p167
      %p169 = scmp.ne.s32.totalorder %s155, %s156
      %p170 = scmp.eq.s32.totalorder %s22, 3
      %p171 = por %p169, %p170
      %p173 = scmp.ne.s32.totalorder %s156, %s172
      %p174 = scmp.eq.s32.totalorder %s22, 0
      %p175 = por %p173, %p174
      %s177 = sadd.s32 %s176, 1
      %p180 = scmp.eq.s32.totalorder %s16, 3
      %p181 = scmp.ne.s32.totalorder %s176, %s178
      %p182 = scmp.eq.s32.totalorder %s16, 0
      %p183 = por %p181, %p182
      %p184 = scmp.ne.s32.totalorder %s176, %s178
      %p185 = scmp.eq.s32.totalorder %s21, 3
      %p186 = por %p184, %p185
      %p187 = scmp.ne.s32.totalorder %s178, %s179
      %p188 = scmp.eq.s32.totalorder %s21, 0
      %p189 = por %p187, %p188
      %p190 = scmp.ne.s32.totalorder %s178, %s179
      %p191 = scmp.eq.s32.totalorder %s22, 3
      %p192 = por %p190, %p191
      %p194 = scmp.ne.s32.totalorder %s179, %s193
      %p195 = scmp.eq.s32.totalorder %s22, 0
      %p196 = por %p194, %p195
      %s198 = sadd.s32 %s197, 1
      %p201 = scmp.eq.s32.totalorder %s16, 3
      %p202 = scmp.ne.s32.totalorder %s197, %s199
      %p203 = scmp.eq.s32.totalorder %s16, 0
      %p204 = por %p202, %p203
      %p205 = scmp.ne.s32.totalorder %s197, %s199
      %p206 = scmp.eq.s32.totalorder %s21, 3
      %p207 = por %p205, %p206
      %p208 = scmp.ne.s32.totalorder %s199, %s200
      %p209 = scmp.eq.s32.totalorder %s21, 0
      %p210 = por %p208, %p209
      %p211 = scmp.ne.s32.totalorder %s199, %s200
      %p212 = scmp.eq.s32.totalorder %s22, 3
      %p213 = por %p211, %p212
      %p215 = scmp.ne.s32.totalorder %s200, %s214
      %p216 = scmp.eq.s32.totalorder %s22, 0
      %p217 = por %p215, %p216
      %s218 = ssub.s32 %s23, %s35
      %p219 = scmp.eq.s32.totalorder %s218, 0
      %s221 = sadd.s32 %s220, 1
      %s222 = scalar_select %p219, %s220, %s221
      %p225 = pneg %p219
      %p226 = scmp.eq.s32.totalorder %s16, 3
      %p227 = por %p225, %p226
      %p228 = scmp.ne.s32.totalorder %s220, %s223
      %p229 = scmp.eq.s32.totalorder %s16, 0
      %p230 = por %p228, %p229
      %p231 = scmp.ne.s32.totalorder %s220, %s223
      %p232 = scmp.eq.s32.totalorder %s21, 3
      %p233 = por %p231, %p232
      %p234 = scmp.ne.s32.totalorder %s223, %s224
      %p235 = scmp.eq.s32.totalorder %s21, 0
      %p236 = por %p234, %p235
      %p237 = scmp.ne.s32.totalorder %s223, %s224
      %p238 = scmp.eq.s32.totalorder %s22, 3
      %p239 = por %p237, %p238
      %p241 = scmp.ne.s32.totalorder %s224, %s240
      %p242 = scmp.eq.s32.totalorder %s22, 0
      %p243 = por %p241, %p242
      %p244 = scmp.le.s32.totalorder 1, %s16
      %p245 = scmp.lt.s32.totalorder %s16, 5
      %p246 = pnand %p244, %p245
      %p247 = pneg %p246
      // Predicated region
      $region9: #{tpu_custom_call.1} parent=5 // pred_check
        _
      $region10: #{tpu_custom_call.1} parent=5 // pred_check_branch
        %249 = sbr.rel (%p246) target = $region12
      $region11: #{tpu_custom_call.1} parent=5 // pred_region
        %s250 = ssub.s32 %s16, 1
        // Predicated region
        $region13: #{tpu_custom_call.1} parent=11 // pred_check
          %p251 = pneg %p54
        $region14: #{tpu_custom_call.1} parent=11 // pred_check_branch
          %253 = sbr.rel (%p251) target = $region16
        $region15: #{tpu_custom_call.1} parent=11 // pred_region
          %s255 = ssub.s32 64, 64
          %256 = vsyncadd [#allocation4], %s255
          %s257 = smul.addr %s25, 64
          %s258 = scalar_lea.hbm %s0, %s257
          %s260 = sshll.u32 [#allocation3], 4
          %s261 = int_to_ptr.vmem [resolvable:$true] %s260
          %263 = dma.hbm_to_vmem [thread:$0]  %s258, 64, %s261, [#allocation4]
        $region16: #{tpu_custom_call.1} parent=11 // pred_fallthru
          _
        // Predicated region
        $region17: #{tpu_custom_call.1} parent=11 // pred_check
          %p264 = pneg %p75
        $region18: #{tpu_custom_call.1} parent=11 // pred_check_branch
          %266 = sbr.rel (%p264) target = $region20
        $region19: #{tpu_custom_call.1} parent=11 // pred_region
          %s268 = ssub.s32 1024, 1024
          %269 = vsyncadd [#allocation7], %s268
          %s270 = sshll.u32 [#allocation6], 4
          %s271 = int_to_ptr.vmem [resolvable:$true] %s270
          %276 = dma.hbm_to_vmem [thread:$0]  %s1, 1024, %s271, [#allocation7], 64, 64, 4
        $region20: #{tpu_custom_call.1} parent=11 // pred_fallthru
          _
        // Predicated region
        $region21: #{tpu_custom_call.1} parent=11 // pred_check
          %p277 = pneg %p96
        $region22: #{tpu_custom_call.1} parent=11 // pred_check_branch
          %279 = sbr.rel (%p277) target = $region24
        $region23: #{tpu_custom_call.1} parent=11 // pred_region
          _
        $region24: #{tpu_custom_call.1} parent=11 // pred_fallthru
          _
        // Predicated region
        $region25: #{tpu_custom_call.1} parent=11 // pred_check
          %p280 = pneg %p189
        $region26: #{tpu_custom_call.1} parent=11 // pred_check_branch
          %282 = sbr.rel (%p280) target = $region28
        $region27: #{tpu_custom_call.1} parent=11 // pred_region
          %s284 = ssub.s32 1024, 1024
          %285 = vsyncadd [#allocation7], %s284
          %s286 = sshll.u32 [#allocation9], 4
          %s287 = int_to_ptr.vmem [resolvable:$true] %s286
          %292 = dma.hbm_to_vmem [thread:$0]  %s5, 1024, %s287, [#allocation7], 64, 64, 4
        $region28: #{tpu_custom_call.1} parent=11 // pred_fallthru
          _
        // Predicated region
        $region29: #{tpu_custom_call.1} parent=11 // pred_check
          %p293 = pneg %p210
        $region30: #{tpu_custom_call.1} parent=11 // pred_check_branch
          %295 = sbr.rel (%p293) target = $region32
        $region31: #{tpu_custom_call.1} parent=11 // pred_region
          _
        $region32: #{tpu_custom_call.1} parent=11 // pred_fallthru
          _
      $region12: #{tpu_custom_call.1} parent=5 // pred_fallthru
        _
      %p296 = scmp.lt.s32.totalorder %s16, 4
      // Predicated region
      $region33: #{tpu_custom_call.1} parent=5 // pred_check
        %p297 = pneg %p296
      $region34: #{tpu_custom_call.1} parent=5 // pred_check_branch
        %299 = sbr.rel (%p297) target = $region36
      $region35: #{tpu_custom_call.1} parent=5 // pred_region
        // Predicated region
        $region37: #{tpu_custom_call.1} parent=35 // pred_check
          %p300 = pneg %p126
        $region38: #{tpu_custom_call.1} parent=35 // pred_check_branch
          %302 = sbr.rel (%p300) target = $region40
        $region39: #{tpu_custom_call.1} parent=35 // pred_region
          %s303 = sand.u32 %s16, 1
          %s304 = scalar_lea.sflag [#allocation4], %s303
          %s305 = sand.u32 %s116, 1
          %s306 = smul.addr %s305, 64
          %s307 = scalar_lea.vmem [#allocation8], %s306
          %s308 = ssub.s32 %s24, 1
          %p309 = scmp.lt.s32.totalorder %s308, 1
          %s310 = scalar_select %p309, %s308, 1
          %p311 = scmp.gt.s32.totalorder %s310, 0
          %s312 = scalar_select %p311, %s310, 0
          %s314 = ssub.s32 1024, 1024
          %315 = vsyncadd %s304, %s314
          %s316 = smul.addr %s312, 16
          %s317 = smul.addr %s316, 64
          %s318 = scalar_lea.hbm %s3, %s317
          %s319 = sshll.u32 %s307, 4
          %s320 = int_to_ptr.vmem [resolvable:$true] %s319
          %325 = dma.hbm_to_vmem [thread:$0]  %s318, 1024, %s320, %s304, 64, 64, 4
        $region40: #{tpu_custom_call.1} parent=35 // pred_fallthru
          _
        // Predicated region
        $region41: #{tpu_custom_call.1} parent=35 // pred_check
          %p326 = pneg %p162
        $region42: #{tpu_custom_call.1} parent=35 // pred_check_branch
          %328 = sbr.rel (%p326) target = $region44
        $region43: #{tpu_custom_call.1} parent=35 // pred_region
          %s329 = ssub.s32 %s24, 1
          %p330 = scmp.lt.s32.totalorder %s329, 1
          %s331 = scalar_select %p330, %s329, 1
          %p332 = scmp.gt.s32.totalorder %s331, 0
          %s333 = scalar_select %p332, %s331, 0
          %p334 = scmp.lt.s32.totalorder %s333, 1
          %s335 = scalar_select %p334, %s333, 1
          %s336 = scalar_lea.vmem %s4, %s335
          %s337 = ssub.s32 %s24, 1
          %p338 = scmp.lt.s32.totalorder %s337, 1
          %s339 = scalar_select %p338, %s337, 1
          %p340 = scmp.gt.s32.totalorder %s339, 0
          %s341 = scalar_select %p340, %s339, 0
        $region44: #{tpu_custom_call.1} parent=35 // pred_fallthru
          _
      $region36: #{tpu_custom_call.1} parent=5 // pred_fallthru
        _
      %p342 = scmp.le.s32.totalorder 1, %s16
      %p343 = scmp.lt.s32.totalorder %s16, 5
      %p344 = pnand %p342, %p343
      %p345 = pneg %p344
      // Predicated region
      $region45: #{tpu_custom_call.1} parent=5 // pred_check
        _
      $region46: #{tpu_custom_call.1} parent=5 // pred_check_branch
        %347 = sbr.rel (%p344) target = $region48
      $region47: #{tpu_custom_call.1} parent=5 // pred_region
        %s348 = ssub.s32 %s16, 1
        // Predicated region
        $region49: #{tpu_custom_call.1} parent=47 // pred_check
          %p349 = pneg %p54
        $region50: #{tpu_custom_call.1} parent=47 // pred_check_branch
          %351 = sbr.rel (%p349) target = $region52
        $region51: #{tpu_custom_call.1} parent=47 // pred_region
          %352 = dma.done [#allocation4], 64
        $region52: #{tpu_custom_call.1} parent=47 // pred_fallthru
          _
        // Predicated region
        $region53: #{tpu_custom_call.1} parent=47 // pred_check
          %p353 = pneg %p75
        $region54: #{tpu_custom_call.1} parent=47 // pred_check_branch
          %355 = sbr.rel (%p353) target = $region56
        $region55: #{tpu_custom_call.1} parent=47 // pred_region
          %356 = dma.done [#allocation7], 1024
        $region56: #{tpu_custom_call.1} parent=47 // pred_fallthru
          _
        %s357 = sand.u32 %s21, 1
        %s358 = scalar_lea.sflag [#allocation4], %s357
        %s359 = sand.u32 %s119, 1
        %s360 = smul.addr %s359, 64
        %s361 = scalar_lea.vmem [#allocation8], %s360
        // Predicated region
        $region57: #{tpu_custom_call.1} parent=47 // pred_check
          %p362 = pneg %p132
        $region58: #{tpu_custom_call.1} parent=47 // pred_check_branch
          %364 = sbr.rel (%p362) target = $region60
        $region59: #{tpu_custom_call.1} parent=47 // pred_region
          %365 = dma.done %s358, 1024
        $region60: #{tpu_custom_call.1} parent=47 // pred_fallthru
          _
        // Predicated region
        $region61: #{tpu_custom_call.1} parent=47 // pred_check
          %p366 = pneg %p189
        $region62: #{tpu_custom_call.1} parent=47 // pred_check_branch
          %368 = sbr.rel (%p366) target = $region64
        $region63: #{tpu_custom_call.1} parent=47 // pred_region
          %369 = dma.done [#allocation7], 1024
        $region64: #{tpu_custom_call.1} parent=47 // pred_fallthru
          _
        %p370 = pneg %p54
        %p371 = pneg %p51
        %p372 = pneg %p75
        %p373 = pneg %p72
        %p374 = pneg %p96
        %p375 = pneg %p93
        %s376 = sand.u32 %s21, 1
        %s377 = scalar_lea.sflag [#allocation4], %s376
        %s378 = sand.u32 %s119, 1
        %s379 = smul.addr %s378, 64
        %s380 = scalar_lea.vmem [#allocation8], %s379
        %p381 = pneg %p132
        %p382 = pneg %p129
        %s383 = ssub.s32 %s26, 1
        %p384 = scmp.lt.s32.totalorder %s383, 1
        %s385 = scalar_select %p384, %s383, 1
        %p386 = scmp.gt.s32.totalorder %s385, 0
        %s387 = scalar_select %p386, %s385, 0
        %p388 = scmp.lt.s32.totalorder %s387, 1
        %s389 = scalar_select %p388, %s387, 1
        %s390 = scalar_lea.vmem %s4, %s389
        %p391 = pneg %p168
        %p392 = pneg %p165
        %p393 = pneg %p189
        %p394 = pneg %p186
        %p395 = pneg %p210
        %p396 = pneg %p207
        %p397 = pneg %p236
        %p398 = pneg %p233
        %s399 = ssub.s32 %s26, 1
        %p400 = scmp.lt.s32.totalorder %s399, 1
        %s401 = scalar_select %p400, %s399, 1
        %p402 = scmp.gt.s32.totalorder %s401, 0
        %s403 = scalar_select %p402, %s401, 0
        %s404 = ssub.s32 %s26, 1
        %p405 = scmp.lt.s32.totalorder %s404, 1
        %s406 = scalar_select %p405, %s404, 1
        %p407 = scmp.gt.s32.totalorder %s406, 0
        %s408 = scalar_select %p407, %s406, 0
        %p409 = scmp.lt.s32.totalorder %s408, 1
        %s410 = scalar_select %p409, %s408, 1
        %s411 = scalar_lea.vmem %s4, %s410
        %s412 = ssub.s32 %s26, 1
        %p413 = scmp.lt.s32.totalorder %s412, 1
        %s414 = scalar_select %p413, %s412, 1
        %p415 = scmp.gt.s32.totalorder %s414, 0
        %s416 = scalar_select %p415, %s414, 0
        %p418 = scmp.eq.s32.totalorder %s26, 0
        // Predicated region
        $region65: #{tpu_custom_call.1} parent=47 // pred_check
          %p419 = pneg %p418
        $region66: #{tpu_custom_call.1} parent=47 // pred_check_branch
          %421 = sbr.rel (%p419) target = $region68
        $region67: #{tpu_custom_call.1} parent=47 // pred_region
          %v422 = vld [vmem:[#allocation3] sm:$0xf]
          %v423 = vld [vmem:[#allocation6] sm:$0xf]
          %v424 = vld [vmem:[#allocation6 + $0x4] sm:$0xf]
          %v425 = vld [vmem:[#allocation6 + $0x8] sm:$0xf]
          %v426 = vld [vmem:[#allocation6 + $0xc] sm:$0xf]
          %v427 = vld [vmem:[#allocation6 + $0x10] sm:$0xf]
          %v428 = vld [vmem:[#allocation6 + $0x14] sm:$0xf]
          %v429 = vld [vmem:[#allocation6 + $0x18] sm:$0xf]
          %v430 = vld [vmem:[#allocation6 + $0x1c] sm:$0xf]
          %v431 = vld [vmem:[#allocation6 + $0x20] sm:$0xf]
          %v432 = vld [vmem:[#allocation6 + $0x24] sm:$0xf]
          %v433 = vld [vmem:[#allocation6 + $0x28] sm:$0xf]
          %v434 = vld [vmem:[#allocation6 + $0x2c] sm:$0xf]
          %v435 = vld [vmem:[#allocation6 + $0x30] sm:$0xf]
          %v436 = vld [vmem:[#allocation6 + $0x34] sm:$0xf]
          %v437 = vld [vmem:[#allocation6 + $0x38] sm:$0xf]
          %v438 = vld [vmem:[#allocation6 + $0x3c] sm:$0xf]
          %v439 = vld [vmem:[%s2] sm:$0x1]
          %v441 = vlaneseq
          %v442 = vshrl.u32 %v441, 7
          %v443 = vsub.s32 0, %v442
          %v444 = vrot.slane %v439, %v443
          %v462 = vunpack.c.l.b16 %v423
          %v463 = vunpack.c.l.b16 %v424
          %v464 = vunpack.c.l.b16 %v425
          %v465 = vunpack.c.l.b16 %v426
          %v466 = vunpack.c.l.b16 %v427
          %v467 = vunpack.c.l.b16 %v428
          %v468 = vunpack.c.l.b16 %v429
          %v469 = vunpack.c.l.b16 %v430
          %v470 = vunpack.c.l.b16 %v431
          %v471 = vunpack.c.l.b16 %v432
          %v472 = vunpack.c.l.b16 %v433
          %v473 = vunpack.c.l.b16 %v434
          %v474 = vunpack.c.l.b16 %v435
          %v475 = vunpack.c.l.b16 %v436
          %v476 = vunpack.c.l.b16 %v437
          %v477 = vunpack.c.l.b16 %v438
          %v478 = vpack.c.b16 %v463, %v462
          %v479 = vpack.c.b16 %v465, %v464
          %v480 = vpack.c.b16 %v467, %v466
          %v481 = vpack.c.b16 %v469, %v468
          %v482 = vpack.c.b16 %v471, %v470
          %v483 = vpack.c.b16 %v473, %v472
          %v484 = vpack.c.b16 %v475, %v474
          %v485 = vpack.c.b16 %v477, %v476
          %494 = vmatprep.subr.bf16.mxu0 0
          %495 = vmatpush1.bf16.msra.mxu0 %v485
          %496 = vmatprep.subr.bf16.mxu0 0
          %497 = vmatpush1.bf16.msra.mxu0 %v484
          %498 = vmatprep.subr.bf16.mxu0 0
          %499 = vmatpush1.bf16.msra.mxu0 %v483
          %500 = vmatprep.subr.bf16.mxu0 0
          %501 = vmatpush1.bf16.msra.mxu0 %v482
          %502 = vmatprep.subr.bf16.mxu0 0
          %503 = vmatpush1.bf16.msra.mxu0 %v481
          %504 = vmatprep.subr.bf16.mxu0 0
          %505 = vmatpush1.bf16.msra.mxu0 %v480
          %506 = vmatprep.subr.bf16.mxu0 0
          %507 = vmatpush1.bf16.msra.mxu0 %v479
          %508 = vmatprep.subr.bf16.mxu0 0
          %509 = vmatpush1.bf16.msra.mxu0 %v478
          %510 = vmatprep.subr.bf16.mxu0 0
          %511 = vmatpush2.bf16.msra.mxu0 0
          %512 = vmatprep.subr.bf16.mxu0 0
          %513 = vmatpush2.bf16.msra.mxu0 0
          %514 = vmatprep.subr.bf16.mxu0 0
          %515 = vmatpush2.bf16.msra.mxu0 0
          %516 = vmatprep.subr.bf16.mxu0 0
          %517 = vmatpush2.bf16.msra.mxu0 0
          %518 = vmatprep.subr.bf16.mxu0 0
          %519 = vmatpush2.bf16.msra.mxu0 0
          %520 = vmatprep.subr.bf16.mxu0 0
          %521 = vmatpush2.bf16.msra.mxu0 0
          %522 = vmatprep.subr.bf16.mxu0 0
          %523 = vmatpush2.bf16.msra.mxu0 0
          %524 = vmatprep.subr.bf16.mxu0 0
          %525 = vmatpush2.bf16.msra.mxu0 0
          %526 = vmatprep.mubr.bf16.mxu0 0
          %527 = vmatmul.mubr.bf16.gmra.mxu0 %v422
          %v528 = vpop.f32.mrf.mxu0
          %v529 = vadd.f32 %v444, %v528
          %v530 = vpop.f32.mrf.mxu0
          %v531 = vpop.f32.mrf.mxu0
          %v532 = vpop.f32.mrf.mxu0
          %533 = vdwg.mxu0
          %v534 = vmax.f32 %v529, 0.0
          %v535 = vpack.c.bf16 %v534, %v534
          %536 = vst [vmem:[#allocation2] sm:$0xf] %v535
        $region68: #{tpu_custom_call.1} parent=47 // pred_fallthru
          _
        %p537 = scmp.ge.s32.totalorder %s26, 1
        %p538 = scmp.le.s32.totalorder %s26, 2
        %p539 = pnand %p537, %p538
        %p540 = pneg %p539
        // Predicated region
        $region69: #{tpu_custom_call.1} parent=47 // pred_check
          _
        $region70: #{tpu_custom_call.1} parent=47 // pred_check_branch
          %542 = sbr.rel (%p539) target = $region72
        $region71: #{tpu_custom_call.1} parent=47 // pred_region
          %v543 = vld [vmem:[#allocation2] sm:$0xf]
          %v544 = vld [vmem:[%s361] sm:$0xf]
          %v545 = vld [vmem:[%s361 + $0x4] sm:$0xf]
          %v546 = vld [vmem:[%s361 + $0x8] sm:$0xf]
          %v547 = vld [vmem:[%s361 + $0xc] sm:$0xf]
          %v548 = vld [vmem:[%s361 + $0x10] sm:$0xf]
          %v549 = vld [vmem:[%s361 + $0x14] sm:$0xf]
          %v550 = vld [vmem:[%s361 + $0x18] sm:$0xf]
          %v551 = vld [vmem:[%s361 + $0x1c] sm:$0xf]
          %v552 = vld [vmem:[%s361 + $0x20] sm:$0xf]
          %v553 = vld [vmem:[%s361 + $0x24] sm:$0xf]
          %v554 = vld [vmem:[%s361 + $0x28] sm:$0xf]
          %v555 = vld [vmem:[%s361 + $0x2c] sm:$0xf]
          %v556 = vld [vmem:[%s361 + $0x30] sm:$0xf]
          %v557 = vld [vmem:[%s361 + $0x34] sm:$0xf]
          %v558 = vld [vmem:[%s361 + $0x38] sm:$0xf]
          %v559 = vld [vmem:[%s361 + $0x3c] sm:$0xf]
          %v560 = vld [vmem:[%s411] sm:$0x1]
          %v562 = vlaneseq
          %v563 = vshrl.u32 %v562, 7
          %v564 = vsub.s32 0, %v563
          %v565 = vrot.slane %v560, %v564
          %v583 = vunpack.c.l.b16 %v544
          %v584 = vunpack.c.l.b16 %v545
          %v585 = vunpack.c.l.b16 %v546
          %v586 = vunpack.c.l.b16 %v547
          %v587 = vunpack.c.l.b16 %v548
          %v588 = vunpack.c.l.b16 %v549
          %v589 = vunpack.c.l.b16 %v550
          %v590 = vunpack.c.l.b16 %v551
          %v591 = vunpack.c.l.b16 %v552
          %v592 = vunpack.c.l.b16 %v553
          %v593 = vunpack.c.l.b16 %v554
          %v594 = vunpack.c.l.b16 %v555
          %v595 = vunpack.c.l.b16 %v556
          %v596 = vunpack.c.l.b16 %v557
          %v597 = vunpack.c.l.b16 %v558
          %v598 = vunpack.c.l.b16 %v559
          %v599 = vpack.c.b16 %v584, %v583
          %v600 = vpack.c.b16 %v586, %v585
          %v601 = vpack.c.b16 %v588, %v587
          %v602 = vpack.c.b16 %v590, %v589
          %v603 = vpack.c.b16 %v592, %v591
          %v604 = vpack.c.b16 %v594, %v593
          %v605 = vpack.c.b16 %v596, %v595
          %v606 = vpack.c.b16 %v598, %v597
          %615 = vmatprep.subr.bf16.mxu0 0
          %616 = vmatpush1.bf16.msra.mxu0 %v606
          %617 = vmatprep.subr.bf16.mxu0 0
          %618 = vmatpush1.bf16.msra.mxu0 %v605
          %619 = vmatprep.subr.bf16.mxu0 0
          %620 = vmatpush1.bf16.msra.mxu0 %v604
          %621 = vmatprep.subr.bf16.mxu0 0
          %622 = vmatpush1.bf16.msra.mxu0 %v603
          %623 = vmatprep.subr.bf16.mxu0 0
          %624 = vmatpush1.bf16.msra.mxu0 %v602
          %625 = vmatprep.subr.bf16.mxu0 0
          %626 = vmatpush1.bf16.msra.mxu0 %v601
          %627 = vmatprep.subr.bf16.mxu0 0
          %628 = vmatpush1.bf16.msra.mxu0 %v600
          %629 = vmatprep.subr.bf16.mxu0 0
          %630 = vmatpush1.bf16.msra.mxu0 %v599
          %631 = vmatprep.subr.bf16.mxu0 0
          %632 = vmatpush2.bf16.msra.mxu0 0
          %633 = vmatprep.subr.bf16.mxu0 0
          %634 = vmatpush2.bf16.msra.mxu0 0
          %635 = vmatprep.subr.bf16.mxu0 0
          %636 = vmatpush2.bf16.msra.mxu0 0
          %637 = vmatprep.subr.bf16.mxu0 0
          %638 = vmatpush2.bf16.msra.mxu0 0
          %639 = vmatprep.subr.bf16.mxu0 0
          %640 = vmatpush2.bf16.msra.mxu0 0
          %641 = vmatprep.subr.bf16.mxu0 0
          %642 = vmatpush2.bf16.msra.mxu0 0
          %643 = vmatprep.subr.bf16.mxu0 0
          %644 = vmatpush2.bf16.msra.mxu0 0
          %645 = vmatprep.subr.bf16.mxu0 0
          %646 = vmatpush2.bf16.msra.mxu0 0
          %647 = vmatprep.mubr.bf16.mxu0 0
          %648 = vmatmul.mubr.bf16.gmra.mxu0 %v543
          %v649 = vpop.f32.mrf.mxu0
          %v650 = vadd.f32 %v565, %v649
          %v651 = vpop.f32.mrf.mxu0
          %v652 = vpop.f32.mrf.mxu0
          %v653 = vpop.f32.mrf.mxu0
          %654 = vdwg.mxu0
          %v655 = vmax.f32 %v650, 0.0
          %v656 = vpack.c.bf16 %v655, %v655
          %657 = vst [vmem:[#allocation2] sm:$0xf] %v656
        $region72: #{tpu_custom_call.1} parent=47 // pred_fallthru
          _
        %p658 = scmp.eq.s32.totalorder %s26, 3
        // Predicated region
        $region73: #{tpu_custom_call.1} parent=47 // pred_check
          %p659 = pneg %p658
        $region74: #{tpu_custom_call.1} parent=47 // pred_check_branch
          %661 = sbr.rel (%p659) target = $region76
        $region75: #{tpu_custom_call.1} parent=47 // pred_region
          %v662 = vld [vmem:[#allocation2] sm:$0xf]
          %v663 = vld [vmem:[#allocation9] sm:$0xf]
          %v664 = vld [vmem:[#allocation9 + $0x4] sm:$0xf]
          %v665 = vld [vmem:[#allocation9 + $0x8] sm:$0xf]
          %v666 = vld [vmem:[#allocation9 + $0xc] sm:$0xf]
          %v667 = vld [vmem:[#allocation9 + $0x10] sm:$0xf]
          %v668 = vld [vmem:[#allocation9 + $0x14] sm:$0xf]
          %v669 = vld [vmem:[#allocation9 + $0x18] sm:$0xf]
          %v670 = vld [vmem:[#allocation9 + $0x1c] sm:$0xf]
          %v671 = vld [vmem:[#allocation9 + $0x20] sm:$0xf]
          %v672 = vld [vmem:[#allocation9 + $0x24] sm:$0xf]
          %v673 = vld [vmem:[#allocation9 + $0x28] sm:$0xf]
          %v674 = vld [vmem:[#allocation9 + $0x2c] sm:$0xf]
          %v675 = vld [vmem:[#allocation9 + $0x30] sm:$0xf]
          %v676 = vld [vmem:[#allocation9 + $0x34] sm:$0xf]
          %v677 = vld [vmem:[#allocation9 + $0x38] sm:$0xf]
          %v678 = vld [vmem:[#allocation9 + $0x3c] sm:$0xf]
          %v679 = vld [vmem:[%s6] sm:$0x1]
          %v681 = vlaneseq
          %v682 = vshrl.u32 %v681, 7
          %v683 = vsub.s32 0, %v682
          %v684 = vrot.slane %v679, %v683
          %v702 = vunpack.c.l.b16 %v663
          %v703 = vunpack.c.l.b16 %v664
          %v704 = vunpack.c.l.b16 %v665
          %v705 = vunpack.c.l.b16 %v666
          %v706 = vunpack.c.l.b16 %v667
          %v707 = vunpack.c.l.b16 %v668
          %v708 = vunpack.c.l.b16 %v669
          %v709 = vunpack.c.l.b16 %v670
          %v710 = vunpack.c.l.b16 %v671
          %v711 = vunpack.c.l.b16 %v672
          %v712 = vunpack.c.l.b16 %v673
          %v713 = vunpack.c.l.b16 %v674
          %v714 = vunpack.c.l.b16 %v675
          %v715 = vunpack.c.l.b16 %v676
          %v716 = vunpack.c.l.b16 %v677
          %v717 = vunpack.c.l.b16 %v678
          %v718 = vpack.c.b16 %v703, %v702
          %v719 = vpack.c.b16 %v705, %v704
          %v720 = vpack.c.b16 %v707, %v706
          %v721 = vpack.c.b16 %v709, %v708
          %v722 = vpack.c.b16 %v711, %v710
          %v723 = vpack.c.b16 %v713, %v712
          %v724 = vpack.c.b16 %v715, %v714
          %v725 = vpack.c.b16 %v717, %v716
          %734 = vmatprep.subr.bf16.mxu0 0
          %735 = vmatpush1.bf16.msra.mxu0 %v725
          %736 = vmatprep.subr.bf16.mxu0 0
          %737 = vmatpush1.bf16.msra.mxu0 %v724
          %738 = vmatprep.subr.bf16.mxu0 0
          %739 = vmatpush1.bf16.msra.mxu0 %v723
          %740 = vmatprep.subr.bf16.mxu0 0
          %741 = vmatpush1.bf16.msra.mxu0 %v722
          %742 = vmatprep.subr.bf16.mxu0 0
          %743 = vmatpush1.bf16.msra.mxu0 %v721
          %744 = vmatprep.subr.bf16.mxu0 0
          %745 = vmatpush1.bf16.msra.mxu0 %v720
          %746 = vmatprep.subr.bf16.mxu0 0
          %747 = vmatpush1.bf16.msra.mxu0 %v719
          %748 = vmatprep.subr.bf16.mxu0 0
          %749 = vmatpush1.bf16.msra.mxu0 %v718
          %750 = vmatprep.subr.bf16.mxu0 0
          %751 = vmatpush2.bf16.msra.mxu0 0
          %752 = vmatprep.subr.bf16.mxu0 0
          %753 = vmatpush2.bf16.msra.mxu0 0
          %754 = vmatprep.subr.bf16.mxu0 0
          %755 = vmatpush2.bf16.msra.mxu0 0
          %756 = vmatprep.subr.bf16.mxu0 0
          %757 = vmatpush2.bf16.msra.mxu0 0
          %758 = vmatprep.subr.bf16.mxu0 0
          %759 = vmatpush2.bf16.msra.mxu0 0
          %760 = vmatprep.subr.bf16.mxu0 0
          %761 = vmatpush2.bf16.msra.mxu0 0
          %762 = vmatprep.subr.bf16.mxu0 0
          %763 = vmatpush2.bf16.msra.mxu0 0
          %764 = vmatprep.subr.bf16.mxu0 0
          %765 = vmatpush2.bf16.msra.mxu0 0
          %766 = vmatprep.mubr.bf16.mxu0 0
          %767 = vmatmul.mubr.bf16.gmra.mxu0 %v662
          %v768 = vpop.f32.mrf.mxu0
          %v769 = vadd.f32 %v684, %v768
          %v770 = vpop.f32.mrf.mxu0
          %v771 = vpop.f32.mrf.mxu0
          %v772 = vpop.f32.mrf.mxu0
          %773 = vdwg.mxu0
          %774 = vst [vmem:[#allocation10] sm:$0xff] %v769
        $region76: #{tpu_custom_call.1} parent=47 // pred_fallthru
          _
        // Predicated region
        $region77: #{tpu_custom_call.1} parent=47 // pred_check
          %p775 = pneg %p233
        $region78: #{tpu_custom_call.1} parent=47 // pred_check_branch
          %777 = sbr.rel (%p775) target = $region80
        $region79: #{tpu_custom_call.1} parent=47 // pred_region
          %s779 = ssub.s32 128, 128
          %780 = vsyncadd [#allocation5], %s779
          %s781 = smul.addr %s25, 128
          %s782 = scalar_lea.hbm %s7, %s781
          %s784 = sshll.u32 [#allocation10], 4
          %s785 = int_to_ptr.vmem [resolvable:$true] %s784
          %787 = dma.vmem_to_hbm [thread:$0]  %s785, 128, %s782, [#allocation5]
        $region80: #{tpu_custom_call.1} parent=47 // pred_fallthru
          _
        // Predicated region
        $region81: #{tpu_custom_call.1} parent=47 // pred_check
          %p788 = pneg %p233
        $region82: #{tpu_custom_call.1} parent=47 // pred_check_branch
          %790 = sbr.rel (%p788) target = $region84
        $region83: #{tpu_custom_call.1} parent=47 // pred_region
          %791 = dma.done [#allocation5], 128
        $region84: #{tpu_custom_call.1} parent=47 // pred_fallthru
          _
      $region48: #{tpu_custom_call.1} parent=5 // pred_fallthru
        _
      %p792 = scmp.le.s32.totalorder 2, %s16
      // Predicated region
      $region85: #{tpu_custom_call.1} parent=5 // pred_check
        %p793 = pneg %p792
      $region86: #{tpu_custom_call.1} parent=5 // pred_check_branch
        %795 = sbr.rel (%p793) target = $region88
      $region87: #{tpu_custom_call.1} parent=5 // pred_region
        %s796 = ssub.s32 %s16, 2
      $region88: #{tpu_custom_call.1} parent=5 // pred_fallthru
        _
    $region6: #{tpu_custom_call.1} parent=1 // loop_footer
      %s20 = sadd.s32 1, %s16
    $region7: #{tpu_custom_call.1} parent=1 // loop_footer_branch
      %15 = sbr.rel target = $region3
    $region8: #{tpu_custom_call.1} parent=1 // loop_exit
      _
    %797 = vsyncpa [#allocation4], 1
    %s798 = scalar_lea.sflag [#allocation4], 1
    %799 = vsyncpa %s798, 1
    %800 = vsyncpa [#allocation7], 1
    %801 = vsyncpa [#allocation5], 1
    %s802 = scalar_lea.sflag [#allocation5], 1
    %803 = vsyncpa %s802, 1

</llo_original>
